<compile_context>
chip_gen: v7x
topology: tpu7x:2x2x1
jax: 0.10.0
libtpu: 0.0.40
codegen_flags: <defaults>
</compile_context>

<pallas_src>
import jax
import jax.numpy as jnp
from jax import lax
from jax.experimental import pallas as pl
from jax.experimental.pallas import tpu as pltpu


def _make_kernel(Cq_pad, C, L, L_pad):
    needs_mask = (L != L_pad)

    def kernel(x_ref, w_ref, b_ref, gamma_ref, out_ref):
        # gamma is an SMEM scalar -> cheap sld, no VMEM block / lane extract.
        gamma = gamma_ref[0]
        x = x_ref[0]                  # (C, L_pad) f32
        w = w_ref[...]                # (2*Cq_pad + C, C)  fused [Wq; Wk; Wv]
        b = b_ref[...]                # (2*Cq_pad + C, 1)  fused [bq; bk; bv]

        # Fused 1x1-conv QKV projection: one MXU launch per grid step.
        # Kept f32 (K = C is tiny; accuracy of softmax stats matters more).
        qkv = jnp.dot(w, x, preferred_element_type=jnp.float32) + b
        # Sublane-aligned static slices (Cq_pad is a multiple of 8).
        q = qkv[:Cq_pad]              # (Cq_pad, L_pad); padded rows are zero
        k = qkv[Cq_pad:2 * Cq_pad]    # (Cq_pad, L_pad); padded rows are zero
        v = qkv[2 * Cq_pad:]          # (C,  L_pad)

        # energy[m, j] = sum_o q[o, m] * k[o, j] — contract axis 0 of both
        # operands directly (no materialized transpose).  bf16 MXU operands,
        # f32 accumulation; zero-padded channel rows contribute nothing.
        energy = lax.dot_general(
            q.astype(jnp.bfloat16), k.astype(jnp.bfloat16),
            dimension_numbers=(((0,), (0,)), ((), ())),
            preferred_element_type=jnp.float32)                  # (L_pad, L_pad)

        if needs_mask:
            # Built once per grid step (not per batch element).  Masking and
            # the row-max shift happen in f32 before any bf16 cast.
            lane = lax.broadcasted_iota(jnp.int32, (L_pad, L_pad), 1)
            energy = jnp.where(lane < L, energy, jnp.float32(-1e30))
            # out contracts v against attn *rows* (query axis), so padded
            # value columns (= padded attn rows) must be zeroed.
            v_lane = lax.broadcasted_iota(jnp.int32, (C, L_pad), 1)
            v = jnp.where(v_lane < L, v, jnp.float32(0.0))

        # Numerically-stable softmax over the key axis; all stats in f32
        # (safe on v5e where VPU/EUP have no bf16).
        energy = energy - jnp.max(energy, axis=-1, keepdims=True)
        p = jnp.exp(energy)
        denom = jnp.sum(p, axis=-1, keepdims=True)
        attn = p * pl.reciprocal(denom, approx=False)            # (L_pad, L_pad)
        # TODO(synk): on v6e/v7x the exp / normalization could run in bf16 for
        # ~2x EUP throughput; kept f32 so the same kernel is exact on v5e.

        # out[c, l] = sum_m v[c, m] * attn[m, l]  == torch.bmm(V, attention).
        # Dominant-FLOP matmul: bf16 operands, f32 accumulation.
        out = jnp.dot(v.astype(jnp.bfloat16), attn.astype(jnp.bfloat16),
                      preferred_element_type=jnp.float32)        # (C, L_pad)

        out_ref[0] = (gamma * out + x).astype(out_ref.dtype)

    return kernel


def self_attention(x, wq, bq, wk, bk, wv, bv, gamma):
    B, C, L = x.shape
    Cq = wq.shape[0]

    # Lane-dense layout: pad L (the lane axis) up to a multiple of 128.
    L_pad = max(128, ((L + 127) // 128) * 128)
    x_p = jnp.pad(x, ((0, 0), (0, 0), (0, L_pad - L))) if L_pad != L else x

    # Sublane-aligned fused QKV weights: pad Cq up to a multiple of 8 with
    # zero rows so the in-kernel q/k/v slices land on (8, 128) tile
    # boundaries.  Zero weight/bias rows contribute nothing to the channel
    # contraction, so the math is unchanged.
    Cq_pad = max(8, ((Cq + 7) // 8) * 8)

    def pad_rows(a, n):
        return jnp.pad(a, ((0, n - a.shape[0]), (0, 0))) if a.shape[0] != n else a

    w_qkv = jnp.concatenate(
        [pad_rows(wq, Cq_pad), pad_rows(wk, Cq_pad), wv], axis=0)   # (Cqkv, C)
    b_qkv = jnp.concatenate(
        [pad_rows(bq, Cq_pad), pad_rows(bk, Cq_pad), bv], axis=0)   # (Cqkv, 1)
    Cqkv = 2 * Cq_pad + C

    gamma_s = jnp.reshape(gamma, (1,)).astype(jnp.float32)          # SMEM scalar

    kernel = _make_kernel(Cq_pad, C, L, L_pad)

    # Advisory cost estimate so XLA schedules the wrapper pad/concat/slice
    # around the kernel correctly.
    flops = B * (2 * Cqkv * C * L_pad
                 + 2 * Cq_pad * L_pad * L_pad
                 + 2 * C * L_pad * L_pad)
    cost = pl.CostEstimate(
        flops=flops,
        transcendentals=B * L_pad * L_pad,
        bytes_accessed=(2 * B * C * L_pad + Cqkv * C + Cqkv + 1) * 4)

    out = pl.pallas_call(
        kernel,
        out_shape=jax.ShapeDtypeStruct((B, C, L_pad), x.dtype),
        grid=(B,),                                                  # one element / step
        in_specs=[
            pl.BlockSpec((1, C, L_pad), lambda i: (i, 0, 0)),       # x slab
            pl.BlockSpec((Cqkv, C), lambda i: (0, 0)),              # fused W_qkv
            pl.BlockSpec((Cqkv, 1), lambda i: (0, 0)),              # fused b_qkv
            pl.BlockSpec(memory_space=pltpu.MemorySpace.SMEM),      # gamma scalar
        ],
        out_specs=pl.BlockSpec((1, C, L_pad), lambda i: (i, 0, 0)),
        compiler_params=pltpu.CompilerParams(
            dimension_semantics=("parallel",)),
        cost_estimate=cost,
    )(x_p, w_qkv, b_qkv, gamma_s)

    return out[:, :, :L] if L_pad != L else out


def self_attention_ref(x, wq, bq, wk, bk, wv, bv, gamma):
    # Pure-JAX reference mirroring the PyTorch forward exactly (f32 end-to-end).
    q = jnp.einsum('oc,bcl->bol', wq, x) + bq.reshape(1, -1, 1)   # (B, Cq, L)
    k = jnp.einsum('oc,bcl->bol', wk, x) + bk.reshape(1, -1, 1)   # (B, Cq, L)
    v = jnp.einsum('oc,bcl->bol', wv, x) + bv.reshape(1, -1, 1)   # (B, C,  L)
    energy = jnp.einsum('bom,boj->bmj', q, k)                     # (B, L, L)
    attn = jax.nn.softmax(energy, axis=-1)
    out = jnp.einsum('bcm,bml->bcl', v, attn)                     # (B, C, L)
    g = jnp.reshape(gamma, ())
    return g * out + x


if __name__ == "__main__":
    B, C, L = 2, 32, 16
    Cq = C // 8  # = 4

    key = jax.random.PRNGKey(0)
    kx, kq, kbq, kk, kbk, kv, kbv = jax.random.split(key, 7)

    x = jax.random.normal(kx, (B, C, L), dtype=jnp.float32)

    # Deterministic synthetic Conv1d(k=1) parameters: weights squeezed to 2D
    # (out, in); biases kept (out, 1) for lane-broadcast.
    scale = 1.0 / jnp.sqrt(jnp.float32(C))
    wq = jax.random.normal(kq, (Cq, C), dtype=jnp.float32) * scale
    bq = jax.random.normal(kbq, (Cq, 1), dtype=jnp.float32) * 0.1
    wk = jax.random.normal(kk, (Cq, C), dtype=jnp.float32) * scale
    bk = jax.random.normal(kbk, (Cq, 1), dtype=jnp.float32) * 0.1
    wv = jax.random.normal(kv, (C, C), dtype=jnp.float32) * scale
    bv = jax.random.normal(kbv, (C, 1), dtype=jnp.float32) * 0.1
    # Module __init__ sets gamma = 0 (output == x); use a nonzero value so the
    # attention path is actually exercised by the check.
    gamma = jnp.full((1,), 0.5, dtype=jnp.float32)

    out = self_attention(x, wq, bq, wk, bk, wv, bv, gamma)
    out = jax.block_until_ready(out)

    ref = self_attention_ref(x, wq, bq, wk, bk, wv, bv, gamma)
    assert out.shape == (B, C, L)
    # Tolerance accommodates the bf16 MXU operands (f32 accumulation) used for
    # the energy and output matmuls; any structural bug would exceed this by
    # orders of magnitude.
    assert jnp.allclose(out, ref, atol=2e-2, rtol=2e-2), "mismatch vs reference"

    print("KERNEL_OK")
</pallas_src>

<mosaic_0001>
module attributes {stable_mosaic.version = 11 : i64} {
  func.func @kernel(%arg0: i32, %arg1: memref<1x32x128xf32, #tpu.memory_space<vmem>>, %arg2: memref<48x32xf32, #tpu.memory_space<vmem>>, %arg3: memref<48x1xf32, #tpu.memory_space<vmem>>, %arg4: memref<1xf32, #tpu.memory_space<smem>>, %arg5: memref<1x32x128xf32, #tpu.memory_space<vmem>>) attributes {dimension_semantics = [#tpu.dimension_semantics<parallel>], iteration_bounds = array<i64: 2>, scalar_prefetch = 0 : i64, scratch_operands = 0 : i64, tpu.core_type = #tpu.core_type<tc>, window_params = [{transform_indices = @transform_0, window_bounds = array<i64: 1, 32, 128>}, {pipeline_mode = #tpu.pipeline_mode<synchronous>, transform_indices = @transform_1, window_bounds = array<i64: 48, 32>}, {pipeline_mode = #tpu.pipeline_mode<synchronous>, transform_indices = @transform_2, window_bounds = array<i64: 48, 1>}, {transform_indices = @transform_3, window_bounds = array<i64: 1>}, {transform_indices = @transform_4, window_bounds = array<i64: 1, 32, 128>}]} {
    %c0 = arith.constant 0 : index
    %0 = memref.load %arg4[%c0] : memref<1xf32, #tpu.memory_space<smem>>
    %c0_0 = arith.constant 0 : index
    %c0_1 = arith.constant 0 : index
    %c0_2 = arith.constant 0 : index
    %1 = vector.load %arg1[%c0_0, %c0_1, %c0_2] : memref<1x32x128xf32, #tpu.memory_space<vmem>>, vector<1x32x128xf32>
    %2 = vector.shape_cast %1 : vector<1x32x128xf32> to vector<32x128xf32>
    %c0_3 = arith.constant 0 : index
    %c0_4 = arith.constant 0 : index
    %3 = vector.load %arg2[%c0_3, %c0_4] : memref<48x32xf32, #tpu.memory_space<vmem>>, vector<48x32xf32>
    %c0_5 = arith.constant 0 : index
    %c0_6 = arith.constant 0 : index
    %4 = vector.load %arg3[%c0_5, %c0_6] : memref<48x1xf32, #tpu.memory_space<vmem>>, vector<48x1xf32>
    %cst = arith.constant dense<0.000000e+00> : vector<48x128xf32>
    %5 = tpu.matmul %3, %2, %cst {dimension_numbers = #tpu.dot_dimension_numbers<[1], [0], [0], [1], [0, 0, 1, 1], [], []>} : vector<48x32xf32>, vector<32x128xf32>, vector<48x128xf32> -> vector<48x128xf32>
    %6 = vector.broadcast %4 : vector<48x1xf32> to vector<48x128xf32>
    %7 = arith.addf %5, %6 : vector<48x128xf32>
    %8 = vector.extract_strided_slice %7 {offsets = [0, 0], sizes = [8, 128], strides = [1, 1]} : vector<48x128xf32> to vector<8x128xf32>
    %9 = vector.extract_strided_slice %7 {offsets = [8, 0], sizes = [8, 128], strides = [1, 1]} : vector<48x128xf32> to vector<8x128xf32>
    %10 = vector.extract_strided_slice %7 {offsets = [16, 0], sizes = [32, 128], strides = [1, 1]} : vector<48x128xf32> to vector<32x128xf32>
    %11 = arith.truncf %8 : vector<8x128xf32> to vector<8x128xbf16>
    %12 = arith.truncf %9 : vector<8x128xf32> to vector<8x128xbf16>
    %cst_7 = arith.constant dense<0.000000e+00> : vector<128x128xf32>
    %13 = tpu.matmul %11, %12, %cst_7 {dimension_numbers = #tpu.dot_dimension_numbers<[0], [0], [1], [1], [0, 1, 1, 1], [], []>} : vector<8x128xbf16>, vector<8x128xbf16>, vector<128x128xf32> -> vector<128x128xf32>
    %14 = tpu.iota {dimensions = array<i32: 1>} : vector<128x128xi32>
    %c16_i32 = arith.constant 16 : i32
    %15 = vector.broadcast %c16_i32 : i32 to vector<128x128xi32>
    %16 = arith.cmpi slt, %14, %15 : vector<128x128xi32>
    %cst_8 = arith.constant -1.000000e+30 : f32
    %17 = vector.broadcast %cst_8 : f32 to vector<128x128xf32>
    %18 = arith.select %16, %13, %17 : vector<128x128xi1>, vector<128x128xf32>
    %19 = tpu.iota {dimensions = array<i32: 1>} : vector<32x128xi32>
    %c16_i32_9 = arith.constant 16 : i32
    %20 = vector.broadcast %c16_i32_9 : i32 to vector<32x128xi32>
    %21 = arith.cmpi slt, %19, %20 : vector<32x128xi32>
    %cst_10 = arith.constant 0.000000e+00 : f32
    %22 = vector.broadcast %cst_10 : f32 to vector<32x128xf32>
    %23 = arith.select %21, %10, %22 : vector<32x128xi1>, vector<32x128xf32>
    %cst_11 = arith.constant dense<0xFF800000> : vector<128xf32>
    %24 = vector.multi_reduction <maximumf>, %18, %cst_11 [1] : vector<128x128xf32> to vector<128xf32>
    %25 = vector.shape_cast %24 : vector<128xf32> to vector<128x1xf32>
    %26 = vector.broadcast %25 : vector<128x1xf32> to vector<128x128xf32>
    %27 = arith.subf %18, %26 : vector<128x128xf32>
    %28 = math.exp %27 : vector<128x128xf32>
    %cst_12 = arith.constant dense<0.000000e+00> : vector<128xf32>
    %29 = vector.multi_reduction <add>, %28, %cst_12 [1] : vector<128x128xf32> to vector<128xf32>
    %30 = vector.shape_cast %29 : vector<128xf32> to vector<128x1xf32>
    %31 = tpu.reciprocal %30 : vector<128x1xf32> -> vector<128x1xf32>
    %32 = vector.broadcast %31 : vector<128x1xf32> to vector<128x128xf32>
    %33 = arith.mulf %28, %32 : vector<128x128xf32>
    %34 = arith.truncf %23 : vector<32x128xf32> to vector<32x128xbf16>
    %35 = arith.truncf %33 : vector<128x128xf32> to vector<128x128xbf16>
    %cst_13 = arith.constant dense<0.000000e+00> : vector<32x128xf32>
    %36 = tpu.matmul %34, %35, %cst_13 {dimension_numbers = #tpu.dot_dimension_numbers<[1], [0], [0], [1], [0, 0, 1, 1], [], []>} : vector<32x128xbf16>, vector<128x128xbf16>, vector<32x128xf32> -> vector<32x128xf32>
    %37 = vector.broadcast %0 : f32 to vector<32x128xf32>
    %38 = arith.mulf %37, %36 : vector<32x128xf32>
    %39 = arith.addf %38, %2 : vector<32x128xf32>
    %c0_14 = arith.constant 0 : index
    %c0_15 = arith.constant 0 : index
    %c0_16 = arith.constant 0 : index
    %40 = vector.load %arg5[%c0_14, %c0_15, %c0_16] : memref<1x32x128xf32, #tpu.memory_space<vmem>>, vector<1x32x128xf32>
    %41 = vector.shape_cast %40 : vector<1x32x128xf32> to vector<32x128xf32>
    %42 = vector.shape_cast %39 : vector<32x128xf32> to vector<1x32x128xf32>
    tpu.vector_store %arg5[%c0_14, %c0_15, %c0_16], %42 {strides = array<i32>} : memref<1x32x128xf32, #tpu.memory_space<vmem>>, vector<1x32x128xf32>,
    return
  }
  func.func @transform_0(%arg0: i32) -> (i32, i32, i32) {
    %c0_i32 = arith.constant 0 : i32
    %c0_i32_0 = arith.constant 0 : i32
    %c0_i32_1 = arith.constant 0 : i32
    return %arg0, %c0_i32, %c0_i32_0 : i32, i32, i32
  }
  func.func @transform_1(%arg0: i32) -> (i32, i32) {
    %c0_i32 = arith.constant 0 : i32
    %c0_i32_0 = arith.constant 0 : i32
    %c0_i32_1 = arith.constant 0 : i32
    return %c0_i32, %c0_i32_0 : i32, i32
  }
  func.func @transform_2(%arg0: i32) -> (i32, i32) {
    %c0_i32 = arith.constant 0 : i32
    %c0_i32_0 = arith.constant 0 : i32
    %c0_i32_1 = arith.constant 0 : i32
    return %c0_i32, %c0_i32_0 : i32, i32
  }
  func.func @transform_3(%arg0: i32) -> i32 {
    %c0_i32 = arith.constant 0 : i32
    %c0_i32_0 = arith.constant 0 : i32
    return %c0_i32 : i32
  }
  func.func @transform_4(%arg0: i32) -> (i32, i32, i32) {
    %c0_i32 = arith.constant 0 : i32
    %c0_i32_0 = arith.constant 0 : i32
    %c0_i32_1 = arith.constant 0 : i32
    return %arg0, %c0_i32, %c0_i32_0 : i32, i32, i32
  }
}

</mosaic_0001>

<llo_original>
// kernel: tpu_custom_call.1
$region0: #{tpu_custom_call.1}
  #allocation0 [shape = 'u32[]', space=smem, size = 0x4, offset = 0x4, fixed_abs, tag = 'smem constant byte address 0x4 - core index']
  #allocation1 [shape = 'u32[144,128]{1,0:T(1,128)}', space=vmem, size = 0x12000, scoped, tag = 'internal scratch']
  #allocation2 [shape = 'f32[1]{0:T(128)S(6)}', space=smem, size = 0x200, scoped, tag = 'scoped memory for tpu_custom_call.1']
  %s0 = inlined_call_operand.vmem [shape: f32[2,32,128], index: 0, kind: input, shape index: {}]
  %s1 = inlined_call_operand.vmem [shape: f32[48,32], index: 1, kind: input, shape index: {}]
  %s2 = inlined_call_operand.vmem [shape: f32[48,1], index: 2, kind: input, shape index: {}]
  %s3 = inlined_call_operand.<no memory space> [shape: f32[1], index: 3, kind: input, shape index: {}]
  %s4 = inlined_call_operand.hbm [shape: f32[2,32,128], index: 4, kind: output, shape index: {}]
  %s5 = sld [smem:[#allocation0]]
  $region49: #{tpu_custom_call.1} parent=0
    _
  %s7 = ssub.s32 1, %s5
  %s8 = scalar_select 0, %s7, %s5
  %9 = sst [smem:[#allocation2]] %s3
  $region1: #{tpu_custom_call.1} parent=0
    #allocation3 [shape = 'u8[32768]{0}', space=vmem, size = 0x8000, scoped, tag = 'output window, operand 0']
    #allocation4 [shape = 's32[2]{0}', space=sflag, size = 0x8, scoped, tag = 'scoped memory for tpu_custom_call.1']
    %10 = vsyncpa [#allocation4], 0
    %s11 = scalar_lea.sflag [#allocation4], 1
    %12 = vsyncpa %s11, 0
    loop: start=0, step=1, limit=4
    $region2: #{tpu_custom_call.1} parent=1 // loop_pre_header
      _
    $region3: #{tpu_custom_call.1} parent=1 // loop_header
      %s14 = sphi 0, %s18
      %p15 = scmp.ge.s32.totalorder %s14, 4
      %s24 = sphi 0, %s26
      %s27 = sphi 0, %s24
      %s28 = sphi 0, %s27
      %s44 = sphi 0, %s28
      %s48 = sphi 0, %s48
      %s50 = sphi 0, %s48
      %s51 = sphi 0, %s50
      %s65 = sphi 0, %s51
      %s69 = sphi 0, %s69
      %s71 = sphi 0, %s69
      %s72 = sphi 0, %s71
      %s86 = sphi 0, %s72
      %s90 = sphi 0, %s90
      %s92 = sphi 0, %s90
      %s93 = sphi 0, %s92
      %s107 = sphi 0, %s93
      %s113 = sphi 0, %s115
      %s116 = sphi 0, %s113
      %s117 = sphi 0, %s116
      %s133 = sphi 0, %s117
    $region4: #{tpu_custom_call.1} parent=1 // loop_header_branch
      %17 = sbr.rel (%p15) target = $region8
    $region5: #{tpu_custom_call.1} parent=1 // loop_body
      %s19 = ssub.s32 %s14, 1
      %s20 = ssub.s32 %s14, 2
      %s21 = sadd.s32 %s14, 1
      %s22 = ssub.s32 %s14, %s21
      %p23 = scmp.eq.s32.totalorder %s22, 0
      %s25 = sadd.s32 %s24, 1
      %s26 = scalar_select %p23, %s24, %s25
      %p29 = pneg %p23
      %p30 = scmp.eq.s32.totalorder %s14, 1
      %p31 = por %p29, %p30
      %p32 = scmp.ne.s32.totalorder %s24, %s27
      %p33 = scmp.eq.s32.totalorder %s14, 0
      %p34 = por %p32, %p33
      %p35 = scmp.ne.s32.totalorder %s24, %s27
      %p36 = scmp.eq.s32.totalorder %s19, 1
      %p37 = por %p35, %p36
      %p38 = scmp.ne.s32.totalorder %s27, %s28
      %p39 = scmp.eq.s32.totalorder %s19, 0
      %p40 = por %p38, %p39
      %p41 = scmp.ne.s32.totalorder %s27, %s28
      %p42 = scmp.eq.s32.totalorder %s20, 1
      %p43 = por %p41, %p42
      %p45 = scmp.ne.s32.totalorder %s28, %s44
      %p46 = scmp.eq.s32.totalorder %s20, 0
      %p47 = por %p45, %p46
      %s49 = sadd.s32 %s48, 1
      %p52 = scmp.eq.s32.totalorder %s14, 1
      %p53 = scmp.ne.s32.totalorder %s48, %s50
      %p54 = scmp.eq.s32.totalorder %s14, 0
      %p55 = por %p53, %p54
      %p56 = scmp.ne.s32.totalorder %s48, %s50
      %p57 = scmp.eq.s32.totalorder %s19, 1
      %p58 = por %p56, %p57
      %p59 = scmp.ne.s32.totalorder %s50, %s51
      %p60 = scmp.eq.s32.totalorder %s19, 0
      %p61 = por %p59, %p60
      %p62 = scmp.ne.s32.totalorder %s50, %s51
      %p63 = scmp.eq.s32.totalorder %s20, 1
      %p64 = por %p62, %p63
      %p66 = scmp.ne.s32.totalorder %s51, %s65
      %p67 = scmp.eq.s32.totalorder %s20, 0
      %p68 = por %p66, %p67
      %s70 = sadd.s32 %s69, 1
      %p73 = scmp.eq.s32.totalorder %s14, 1
      %p74 = scmp.ne.s32.totalorder %s69, %s71
      %p75 = scmp.eq.s32.totalorder %s14, 0
      %p76 = por %p74, %p75
      %p77 = scmp.ne.s32.totalorder %s69, %s71
      %p78 = scmp.eq.s32.totalorder %s19, 1
      %p79 = por %p77, %p78
      %p80 = scmp.ne.s32.totalorder %s71, %s72
      %p81 = scmp.eq.s32.totalorder %s19, 0
      %p82 = por %p80, %p81
      %p83 = scmp.ne.s32.totalorder %s71, %s72
      %p84 = scmp.eq.s32.totalorder %s20, 1
      %p85 = por %p83, %p84
      %p87 = scmp.ne.s32.totalorder %s72, %s86
      %p88 = scmp.eq.s32.totalorder %s20, 0
      %p89 = por %p87, %p88
      %s91 = sadd.s32 %s90, 1
      %p94 = scmp.eq.s32.totalorder %s14, 1
      %p95 = scmp.ne.s32.totalorder %s90, %s92
      %p96 = scmp.eq.s32.totalorder %s14, 0
      %p97 = por %p95, %p96
      %p98 = scmp.ne.s32.totalorder %s90, %s92
      %p99 = scmp.eq.s32.totalorder %s19, 1
      %p100 = por %p98, %p99
      %p101 = scmp.ne.s32.totalorder %s92, %s93
      %p102 = scmp.eq.s32.totalorder %s19, 0
      %p103 = por %p101, %p102
      %p104 = scmp.ne.s32.totalorder %s92, %s93
      %p105 = scmp.eq.s32.totalorder %s20, 1
      %p106 = por %p104, %p105
      %p108 = scmp.ne.s32.totalorder %s93, %s107
      %p109 = scmp.eq.s32.totalorder %s20, 0
      %p110 = por %p108, %p109
      %s111 = ssub.s32 %s14, %s21
      %p112 = scmp.eq.s32.totalorder %s111, 0
      %s114 = sadd.s32 %s113, 1
      %s115 = scalar_select %p112, %s113, %s114
      %p118 = pneg %p112
      %p119 = scmp.eq.s32.totalorder %s14, 1
      %p120 = por %p118, %p119
      %p121 = scmp.ne.s32.totalorder %s113, %s116
      %p122 = scmp.eq.s32.totalorder %s14, 0
      %p123 = por %p121, %p122
      %p124 = scmp.ne.s32.totalorder %s113, %s116
      %p125 = scmp.eq.s32.totalorder %s19, 1
      %p126 = por %p124, %p125
      %p127 = scmp.ne.s32.totalorder %s116, %s117
      %p128 = scmp.eq.s32.totalorder %s19, 0
      %p129 = por %p127, %p128
      %p130 = scmp.ne.s32.totalorder %s116, %s117
      %p131 = scmp.eq.s32.totalorder %s20, 1
      %p132 = por %p130, %p131
      %p134 = scmp.ne.s32.totalorder %s117, %s133
      %p135 = scmp.eq.s32.totalorder %s20, 0
      %p136 = por %p134, %p135
      %p137 = scmp.le.s32.totalorder 1, %s14
      %p138 = scmp.lt.s32.totalorder %s14, 3
      %p139 = pnand %p137, %p138
      %p140 = pneg %p139
      // Predicated region
      $region9: #{tpu_custom_call.1} parent=5 // pred_check
        _
      $region10: #{tpu_custom_call.1} parent=5 // pred_check_branch
        %142 = sbr.rel (%p139) target = $region12
      $region11: #{tpu_custom_call.1} parent=5 // pred_region
        %s143 = ssub.s32 %s14, 1
        // Predicated region
        $region13: #{tpu_custom_call.1} parent=11 // pred_check
          %p144 = pneg %p61
        $region14: #{tpu_custom_call.1} parent=11 // pred_check_branch
          %146 = sbr.rel (%p144) target = $region16
        $region15: #{tpu_custom_call.1} parent=11 // pred_region
          _
        $region16: #{tpu_custom_call.1} parent=11 // pred_fallthru
          _
        // Predicated region
        $region17: #{tpu_custom_call.1} parent=11 // pred_check
          %p147 = pneg %p82
        $region18: #{tpu_custom_call.1} parent=11 // pred_check_branch
          %149 = sbr.rel (%p147) target = $region20
        $region19: #{tpu_custom_call.1} parent=11 // pred_region
          _
        $region20: #{tpu_custom_call.1} parent=11 // pred_fallthru
          _
        // Predicated region
        $region21: #{tpu_custom_call.1} parent=11 // pred_check
          %p150 = pneg %p103
        $region22: #{tpu_custom_call.1} parent=11 // pred_check_branch
          %152 = sbr.rel (%p150) target = $region24
        $region23: #{tpu_custom_call.1} parent=11 // pred_region
          _
        $region24: #{tpu_custom_call.1} parent=11 // pred_fallthru
          _
      $region12: #{tpu_custom_call.1} parent=5 // pred_fallthru
        _
      %p153 = scmp.lt.s32.totalorder %s14, 2
      // Predicated region
      $region25: #{tpu_custom_call.1} parent=5 // pred_check
        %p154 = pneg %p153
      $region26: #{tpu_custom_call.1} parent=5 // pred_check_branch
        %156 = sbr.rel (%p154) target = $region28
      $region27: #{tpu_custom_call.1} parent=5 // pred_region
        // Predicated region
        $region29: #{tpu_custom_call.1} parent=27 // pred_check
          %p157 = pneg %p34
        $region30: #{tpu_custom_call.1} parent=27 // pred_check_branch
          %159 = sbr.rel (%p157) target = $region32
        $region31: #{tpu_custom_call.1} parent=27 // pred_region
          %p160 = scmp.lt.s32.totalorder %s14, 1
          %s161 = scalar_select %p160, %s14, 1
          %s162 = smul.addr %s161, 4
          %s163 = smul.addr %s162, 8
          %s164 = scalar_lea.vmem %s0, %s163
        $region32: #{tpu_custom_call.1} parent=27 // pred_fallthru
          _
      $region28: #{tpu_custom_call.1} parent=5 // pred_fallthru
        _
      %p165 = scmp.le.s32.totalorder 1, %s14
      %p166 = scmp.lt.s32.totalorder %s14, 3
      %p167 = pnand %p165, %p166
      %p168 = pneg %p167
      // Predicated region
      $region33: #{tpu_custom_call.1} parent=5 // pred_check
        _
      $region34: #{tpu_custom_call.1} parent=5 // pred_check_branch
        %170 = sbr.rel (%p167) target = $region36
      $region35: #{tpu_custom_call.1} parent=5 // pred_region
        %s171 = ssub.s32 %s14, 1
        %p172 = scmp.lt.s32.totalorder %s19, 1
        %s173 = scalar_select %p172, %s19, 1
        %s174 = smul.addr %s173, 4
        %s175 = smul.addr %s174, 8
        %s176 = scalar_lea.vmem %s0, %s175
        %p177 = pneg %p40
        %p178 = pneg %p37
        %p179 = pneg %p61
        %p180 = pneg %p58
        %p181 = pneg %p82
        %p182 = pneg %p79
        %p183 = pneg %p103
        %p184 = pneg %p100
        %p185 = pneg %p129
        %p186 = pneg %p126
        %s187 = sand.u32 %s116, 1
        %s188 = scalar_lea.sflag [#allocation4], %s187
        %s189 = sand.u32 %s116, 1
        %s190 = smul.addr %s189, 32
        %s191 = scalar_lea.vmem [#allocation3], %s190
        %p192 = scmp.lt.s32.totalorder %s19, 1
        %s193 = scalar_select %p192, %s19, 1
        %s194 = smul.addr %s193, 4
        %s195 = smul.addr %s194, 8
        %s196 = scalar_lea.vmem %s0, %s195
        %s198 = sld [smem:[#allocation2]]
        %v199 = vld [vmem:[%s196] sm:$0xff]
        %v200 = vld [vmem:[%s196 + $0x8] sm:$0xff]
        %v201 = vld [vmem:[%s196 + $0x10] sm:$0xff]
        %v202 = vld [vmem:[%s196 + $0x18] sm:$0xff]
        %v203 = vld [vmem:[%s1] sm:$0xff]
        %v204 = vld [vmem:[%s1 + $0x8] sm:$0xff]
        %v205 = vld [vmem:[%s1 + $0x10] sm:$0xff]
        %v206 = vld [vmem:[%s1 + $0x18] sm:$0xff]
        %v207 = vld [vmem:[%s1 + $0x20] sm:$0xff]
        %v208 = vld [vmem:[%s1 + $0x28] sm:$0xff]
        %v209 = vld [vmem:[%s2] sm:$0xff]
        %v210 = vld [vmem:[%s2 + $0x8] sm:$0xff]
        %v211 = vld [vmem:[%s2 + $0x10] sm:$0xff]
        %v212 = vld [vmem:[%s2 + $0x18] sm:$0xff]
        %v213 = vld [vmem:[%s2 + $0x20] sm:$0xff]
        %v214 = vld [vmem:[%s2 + $0x28] sm:$0xff]
        %216 = vset.pattern.permute.xlu0 0
        %217 = vperm.xlu0 %216, %v209
        %v218 = vpop.permute.xlu0 %217
        %221 = vset.pattern.permute.xlu0 0
        %222 = vperm.xlu0 %221, %v210
        %v223 = vpop.permute.xlu0 %222
        %226 = vset.pattern.permute.xlu0 0
        %227 = vperm.xlu0 %226, %v211
        %v228 = vpop.permute.xlu0 %227
        %231 = vset.pattern.permute.xlu0 0
        %232 = vperm.xlu0 %231, %v212
        %v233 = vpop.permute.xlu0 %232
        %236 = vset.pattern.permute.xlu0 0
        %237 = vperm.xlu0 %236, %v213
        %v238 = vpop.permute.xlu0 %237
        %241 = vset.pattern.permute.xlu0 0
        %242 = vperm.xlu0 %241, %v214
        %v243 = vpop.permute.xlu0 %242
        %vm245 = vcmask 261120
        %v247 = vsel %vm245, %v203, 0
        %v250 = vsel %vm245, %v204, 0
        %v253 = vsel %vm245, %v205, 0
        %v256 = vsel %vm245, %v206, 0
        %v259 = vsel %vm245, %v207, 0
        %v262 = vsel %vm245, %v208, 0
        %264 = vmatprep.subr.mxu0 0.0
        %265 = vmatpush1.msra.mxu0 %v199
        %266 = vmatprep.subr.mxu0 0.0
        %267 = vmatpush1.msra.mxu0 %v200
        %268 = vmatprep.subr.mxu0 0.0
        %269 = vmatpush1.msra.mxu0 %v201
        %270 = vmatprep.subr.mxu0 0.0
        %271 = vmatpush1.msra.mxu0 %v202
        %272 = vmatprep.subr.mxu0 0.0
        %273 = vmatpush1.msra.mxu0 0.0
        %274 = vmatprep.subr.mxu0 0.0
        %275 = vmatpush1.msra.mxu0 0.0
        %276 = vmatprep.subr.mxu0 0.0
        %277 = vmatpush1.msra.mxu0 0.0
        %278 = vmatprep.subr.mxu0 0.0
        %279 = vmatpush1.msra.mxu0 0.0
        %280 = vmatprep.subr.mxu0 0.0
        %281 = vmatpush1.msra.mxu0 0.0
        %282 = vmatprep.subr.mxu0 0.0
        %283 = vmatpush1.msra.mxu0 0.0
        %284 = vmatprep.subr.mxu0 0.0
        %285 = vmatpush1.msra.mxu0 0.0
        %286 = vmatprep.subr.mxu0 0.0
        %287 = vmatpush1.msra.mxu0 0.0
        %288 = vmatprep.subr.mxu0 0.0
        %289 = vmatpush1.msra.mxu0 0.0
        %290 = vmatprep.subr.mxu0 0.0
        %291 = vmatpush1.msra.mxu0 0.0
        %292 = vmatprep.subr.mxu0 0.0
        %293 = vmatpush1.msra.mxu0 0.0
        %294 = vmatprep.subr.mxu0 0.0
        %295 = vmatpush1.msra.mxu0 0.0
        %296 = vmatprep.subr.mxu0 0.0
        %297 = vmatpush1.msra.mxu0 0.0
        %298 = vmatprep.subr.mxu0 0.0
        %299 = vmatpush1.msra.mxu0 0.0
        %300 = vmatprep.subr.mxu0 0.0
        %301 = vmatpush1.msra.mxu0 0.0
        %302 = vmatprep.subr.mxu0 0.0
        %303 = vmatpush1.msra.mxu0 0.0
        %304 = vmatprep.subr.mxu0 0.0
        %305 = vmatpush1.msra.mxu0 0.0
        %306 = vmatprep.subr.mxu0 0.0
        %307 = vmatpush1.msra.mxu0 0.0
        %308 = vmatprep.subr.mxu0 0.0
        %309 = vmatpush1.msra.mxu0 0.0
        %310 = vmatprep.subr.mxu0 0.0
        %311 = vmatpush1.msra.mxu0 0.0
        %312 = vmatprep.subr.mxu0 0.0
        %313 = vmatpush1.msra.mxu0 0.0
        %314 = vmatprep.subr.mxu0 0.0
        %315 = vmatpush1.msra.mxu0 0.0
        %316 = vmatprep.subr.mxu0 0.0
        %317 = vmatpush1.msra.mxu0 0.0
        %318 = vmatprep.subr.mxu0 0.0
        %319 = vmatpush1.msra.mxu0 0.0
        %320 = vmatprep.subr.mxu0 0.0
        %321 = vmatpush1.msra.mxu0 0.0
        %322 = vmatprep.subr.mxu0 0.0
        %323 = vmatpush1.msra.mxu0 0.0
        %324 = vmatprep.subr.mxu0 0.0
        %325 = vmatpush1.msra.mxu0 0.0
        %326 = vmatprep.subr.mxu0 0.0
        %327 = vmatpush1.msra.mxu0 0.0
        %328 = vmatprep.mubr.f32.mxu0 0.0
        %329 = vmatmul.mubr.f32.gmra.mrb[0].mxu0 %v247
        %v330 = vpop.f32.mrb[0].mxu0
        %v331 = vadd.f32 %v218, %v330
        %v332 = vpop.f32.mrb[0].mxu0
        %333 = vmatprep.mubr.f32.mxu0 0.0
        %334 = vmatmul.mubr.f32.gmra.mrb[0].mxu0 %v250
        %v335 = vpop.f32.mrb[0].mxu0
        %v336 = vadd.f32 %v223, %v335
        %v337 = vpop.f32.mrb[0].mxu0
        %338 = vmatprep.mubr.f32.mxu0 0.0
        %339 = vmatmul.mubr.f32.gmra.mrb[0].mxu0 %v253
        %v340 = vpop.f32.mrb[0].mxu0
        %v341 = vadd.f32 %v228, %v340
        %v342 = vpop.f32.mrb[0].mxu0
        %343 = vmatprep.mubr.f32.mxu0 0.0
        %344 = vmatmul.mubr.f32.gmra.mrb[0].mxu0 %v256
        %v345 = vpop.f32.mrb[0].mxu0
        %v346 = vadd.f32 %v233, %v345
        %v347 = vpop.f32.mrb[0].mxu0
        %348 = vmatprep.mubr.f32.mxu0 0.0
        %349 = vmatmul.mubr.f32.gmra.mrb[0].mxu0 %v259
        %v350 = vpop.f32.mrb[0].mxu0
        %v351 = vadd.f32 %v238, %v350
        %v352 = vpop.f32.mrb[0].mxu0
        %353 = vmatprep.mubr.f32.mxu0 0.0
        %354 = vmatmul.mubr.f32.gmra.mrb[0].mxu0 %v262
        %v355 = vpop.f32.mrb[0].mxu0
        %v356 = vadd.f32 %v243, %v355
        %v357 = vpop.f32.mrb[0].mxu0
        %358 = vdwg.mxu0
        %v359 = vpack.c.bf16 %v331, %v331
        %v360 = vpack.c.bf16 %v336, %v336
        %361 = vxpose.xlu0.c.b16.start [1/8] %v359, 128
        %362 = vxpose.xlu0.c.b16.cont [2/8] 0, 128
        %363 = vxpose.xlu0.c.b16.cont [3/8] 0, 128
        %364 = vxpose.xlu0.c.b16.cont [4/8] 0, 128
        %365 = vxpose.xlu0.c.b16.cont [5/8] 0, 128
        %366 = vxpose.xlu0.c.b16.cont [6/8] 0, 128
        %367 = vxpose.xlu0.c.b16.cont [7/8] 0, 128
        %368 = vxpose.xlu0.c.b16.end [8/8] 0, 128
        %v369 = vpop.trf.xlu0
        %v370 = vpop.trf.xlu0
        %v371 = vpop.trf.xlu0
        %v372 = vpop.trf.xlu0
        %v373 = vpop.trf.xlu0
        %v374 = vpop.trf.xlu0
        %v375 = vpop.trf.xlu0
        %v376 = vpop.trf.xlu0
        %vm377 = vcmask 64512
        %v379 = vsel %vm377, %v369, 0
        %v382 = vsel %vm377, %v370, 0
        %v385 = vsel %vm377, %v371, 0
        %v388 = vsel %vm377, %v372, 0
        %v391 = vsel %vm377, %v373, 0
        %v394 = vsel %vm377, %v374, 0
        %v397 = vsel %vm377, %v375, 0
        %v400 = vsel %vm377, %v376, 0
        %vm402 = vcmask 1043456
        %v404 = vsel %vm402, %v360, 0
        %406 = vmatprep.subr.bf16.mxu0 0
        %407 = vmatpush1.bf16.msra.mxu0 %v404
        %408 = vmatprep.subr.bf16.mxu0 0
        %409 = vmatpush1.bf16.msra.mxu0 0
        %410 = vmatprep.subr.bf16.mxu0 0
        %411 = vmatpush1.bf16.msra.mxu0 0
        %412 = vmatprep.subr.bf16.mxu0 0
        %413 = vmatpush1.bf16.msra.mxu0 0
        %414 = vmatprep.subr.bf16.mxu0 0
        %415 = vmatpush1.bf16.msra.mxu0 0
        %416 = vmatprep.subr.bf16.mxu0 0
        %417 = vmatpush1.bf16.msra.mxu0 0
        %418 = vmatprep.subr.bf16.mxu0 0
        %419 = vmatpush1.bf16.msra.mxu0 0
        %420 = vmatprep.subr.bf16.mxu0 0
        %421 = vmatpush1.bf16.msra.mxu0 0
        %422 = vmatprep.subr.bf16.mxu0 0
        %423 = vmatpush1.bf16.msra.mxu0 0
        %424 = vmatprep.subr.bf16.mxu0 0
        %425 = vmatpush1.bf16.msra.mxu0 0
        %426 = vmatprep.subr.bf16.mxu0 0
        %427 = vmatpush1.bf16.msra.mxu0 0
        %428 = vmatprep.subr.bf16.mxu0 0
        %429 = vmatpush1.bf16.msra.mxu0 0
        %430 = vmatprep.subr.bf16.mxu0 0
        %431 = vmatpush1.bf16.msra.mxu0 0
        %432 = vmatprep.subr.bf16.mxu0 0
        %433 = vmatpush1.bf16.msra.mxu0 0
        %434 = vmatprep.subr.bf16.mxu0 0
        %435 = vmatpush1.bf16.msra.mxu0 0
        %436 = vmatprep.subr.bf16.mxu0 0
        %437 = vmatpush1.bf16.msra.mxu0 0
        %438 = vmatprep.mubr.bf16.mxu0 0
        %439 = vmatmul.mubr.bf16.gmra.mrb[0].mxu0 %v379
        %v440 = vpop.f32.mrb[0].mxu0
        %v441 = vadd.f32 0.0, %v440
        %v442 = vpop.f32.mrb[0].mxu0
        %v443 = vpop.f32.mrb[0].mxu0
        %v444 = vadd.f32 0.0, %v443
        %v445 = vpop.f32.mrb[0].mxu0
        %446 = vmatprep.mubr.bf16.mxu0 0
        %447 = vmatmul.mubr.bf16.gmra.mrb[0].mxu0 %v382
        %v448 = vpop.f32.mrb[0].mxu0
        %v449 = vadd.f32 0.0, %v448
        %v450 = vpop.f32.mrb[0].mxu0
        %v451 = vpop.f32.mrb[0].mxu0
        %v452 = vadd.f32 0.0, %v451
        %v453 = vpop.f32.mrb[0].mxu0
        %454 = vmatprep.mubr.bf16.mxu0 0
        %455 = vmatmul.mubr.bf16.gmra.mrb[0].mxu0 %v385
        %v456 = vpop.f32.mrb[0].mxu0
        %v457 = vadd.f32 0.0, %v456
        %v458 = vpop.f32.mrb[0].mxu0
        %v459 = vpop.f32.mrb[0].mxu0
        %v460 = vadd.f32 0.0, %v459
        %v461 = vpop.f32.mrb[0].mxu0
        %462 = vmatprep.mubr.bf16.mxu0 0
        %463 = vmatmul.mubr.bf16.gmra.mrb[0].mxu0 %v388
        %v464 = vpop.f32.mrb[0].mxu0
        %v465 = vadd.f32 0.0, %v464
        %v466 = vpop.f32.mrb[0].mxu0
        %v467 = vpop.f32.mrb[0].mxu0
        %v468 = vadd.f32 0.0, %v467
        %v469 = vpop.f32.mrb[0].mxu0
        %470 = vmatprep.mubr.bf16.mxu0 0
        %471 = vmatmul.mubr.bf16.gmra.mrb[0].mxu0 %v391
        %v472 = vpop.f32.mrb[0].mxu0
        %v473 = vadd.f32 0.0, %v472
        %v474 = vpop.f32.mrb[0].mxu0
        %v475 = vpop.f32.mrb[0].mxu0
        %v476 = vadd.f32 0.0, %v475
        %v477 = vpop.f32.mrb[0].mxu0
        %478 = vmatprep.mubr.bf16.mxu0 0
        %479 = vmatmul.mubr.bf16.gmra.mrb[0].mxu0 %v394
        %v480 = vpop.f32.mrb[0].mxu0
        %v481 = vadd.f32 0.0, %v480
        %v482 = vpop.f32.mrb[0].mxu0
        %v483 = vpop.f32.mrb[0].mxu0
        %v484 = vadd.f32 0.0, %v483
        %v485 = vpop.f32.mrb[0].mxu0
        %486 = vmatprep.mubr.bf16.mxu0 0
        %487 = vmatmul.mubr.bf16.gmra.mrb[0].mxu0 %v397
        %v488 = vpop.f32.mrb[0].mxu0
        %v489 = vadd.f32 0.0, %v488
        %v490 = vpop.f32.mrb[0].mxu0
        %v491 = vpop.f32.mrb[0].mxu0
        %v492 = vadd.f32 0.0, %v491
        %v493 = vpop.f32.mrb[0].mxu0
        %494 = vmatprep.mubr.bf16.mxu0 0
        %495 = vmatmul.mubr.bf16.gmra.mrb[0].mxu0 %v400
        %v496 = vpop.f32.mrb[0].mxu0
        %v497 = vadd.f32 0.0, %v496
        %v498 = vpop.f32.mrb[0].mxu0
        %v499 = vpop.f32.mrb[0].mxu0
        %v500 = vadd.f32 0.0, %v499
        %v501 = vpop.f32.mrb[0].mxu0
        %502 = vdwg.mxu0
        %v503 = vlaneseq
        %v504 = vand.u32 %v503, 127
        %vm505 = vcmp.lt.s32.totalorder %v504, 16
        %v506 = vsel %vm505, %v441, -1e+30
        %v507 = vsel %vm505, %v444, -1e+30
        %v508 = vsel %vm505, %v449, -1e+30
        %v509 = vsel %vm505, %v452, -1e+30
        %v510 = vsel %vm505, %v457, -1e+30
        %v511 = vsel %vm505, %v460, -1e+30
        %v512 = vsel %vm505, %v465, -1e+30
        %v513 = vsel %vm505, %v468, -1e+30
        %v514 = vsel %vm505, %v473, -1e+30
        %v515 = vsel %vm505, %v476, -1e+30
        %v516 = vsel %vm505, %v481, -1e+30
        %v517 = vsel %vm505, %v484, -1e+30
        %v518 = vsel %vm505, %v489, -1e+30
        %v519 = vsel %vm505, %v492, -1e+30
        %v520 = vsel %vm505, %v497, -1e+30
        %v521 = vsel %vm505, %v500, -1e+30
        %v522 = vsel %vm505, %v341, 0.0
        %v523 = vsel %vm505, %v346, 0.0
        %v524 = vsel %vm505, %v351, 0.0
        %v525 = vsel %vm505, %v356, 0.0
        %526 = vmax.xlane.f32.xlu0 %v506
        %v527 = vpop.xlane.xlu0 %526
        %528 = vmax.xlane.f32.xlu0 %v507
        %v529 = vpop.xlane.xlu0 %528
        %530 = vmax.xlane.f32.xlu0 %v508
        %v531 = vpop.xlane.xlu0 %530
        %532 = vmax.xlane.f32.xlu0 %v509
        %v533 = vpop.xlane.xlu0 %532
        %534 = vmax.xlane.f32.xlu0 %v510
        %v535 = vpop.xlane.xlu0 %534
        %536 = vmax.xlane.f32.xlu0 %v511
        %v537 = vpop.xlane.xlu0 %536
        %538 = vmax.xlane.f32.xlu0 %v512
        %v539 = vpop.xlane.xlu0 %538
        %540 = vmax.xlane.f32.xlu0 %v513
        %v541 = vpop.xlane.xlu0 %540
        %542 = vmax.xlane.f32.xlu0 %v514
        %v543 = vpop.xlane.xlu0 %542
        %544 = vmax.xlane.f32.xlu0 %v515
        %v545 = vpop.xlane.xlu0 %544
        %546 = vmax.xlane.f32.xlu0 %v516
        %v547 = vpop.xlane.xlu0 %546
        %548 = vmax.xlane.f32.xlu0 %v517
        %v549 = vpop.xlane.xlu0 %548
        %550 = vmax.xlane.f32.xlu0 %v518
        %v551 = vpop.xlane.xlu0 %550
        %552 = vmax.xlane.f32.xlu0 %v519
        %v553 = vpop.xlane.xlu0 %552
        %554 = vmax.xlane.f32.xlu0 %v520
        %v555 = vpop.xlane.xlu0 %554
        %556 = vmax.xlane.f32.xlu0 %v521
        %v557 = vpop.xlane.xlu0 %556
        %v558 = vsub.f32 %v506, %v527
        %v559 = vsub.f32 %v507, %v529
        %v560 = vsub.f32 %v508, %v531
        %v561 = vsub.f32 %v509, %v533
        %v562 = vsub.f32 %v510, %v535
        %v563 = vsub.f32 %v511, %v537
        %v564 = vsub.f32 %v512, %v539
        %v565 = vsub.f32 %v513, %v541
        %v566 = vsub.f32 %v514, %v543
        %v567 = vsub.f32 %v515, %v545
        %v568 = vsub.f32 %v516, %v547
        %v569 = vsub.f32 %v517, %v549
        %v570 = vsub.f32 %v518, %v551
        %v571 = vsub.f32 %v519, %v553
        %v572 = vsub.f32 %v520, %v555
        %v573 = vsub.f32 %v521, %v557
        %v574 = vmul.f32 %v558, 1.442695
        %v575 = vpow.pop %v574
        %v576 = vmul.f32 %v559, 1.442695
        %v577 = vpow.pop %v576
        %v578 = vmul.f32 %v560, 1.442695
        %v579 = vpow.pop %v578
        %v580 = vmul.f32 %v561, 1.442695
        %v581 = vpow.pop %v580
        %v582 = vmul.f32 %v562, 1.442695
        %v583 = vpow.pop %v582
        %v584 = vmul.f32 %v563, 1.442695
        %v585 = vpow.pop %v584
        %v586 = vmul.f32 %v564, 1.442695
        %v587 = vpow.pop %v586
        %v588 = vmul.f32 %v565, 1.442695
        %v589 = vpow.pop %v588
        %v590 = vmul.f32 %v566, 1.442695
        %v591 = vpow.pop %v590
        %v592 = vmul.f32 %v567, 1.442695
        %v593 = vpow.pop %v592
        %v594 = vmul.f32 %v568, 1.442695
        %v595 = vpow.pop %v594
        %v596 = vmul.f32 %v569, 1.442695
        %v597 = vpow.pop %v596
        %v598 = vmul.f32 %v570, 1.442695
        %v599 = vpow.pop %v598
        %v600 = vmul.f32 %v571, 1.442695
        %v601 = vpow.pop %v600
        %v602 = vmul.f32 %v572, 1.442695
        %v603 = vpow.pop %v602
        %v604 = vmul.f32 %v573, 1.442695
        %v605 = vpow.pop %v604
        %606 = vadd.xlane.f32.xlu0 %v575
        %v607 = vpop.xlane.xlu0 %606
        %608 = vadd.xlane.f32.xlu0 %v577
        %v609 = vpop.xlane.xlu0 %608
        %610 = vadd.xlane.f32.xlu0 %v579
        %v611 = vpop.xlane.xlu0 %610
        %612 = vadd.xlane.f32.xlu0 %v581
        %v613 = vpop.xlane.xlu0 %612
        %614 = vadd.xlane.f32.xlu0 %v583
        %v615 = vpop.xlane.xlu0 %614
        %616 = vadd.xlane.f32.xlu0 %v585
        %v617 = vpop.xlane.xlu0 %616
        %618 = vadd.xlane.f32.xlu0 %v587
        %v619 = vpop.xlane.xlu0 %618
        %620 = vadd.xlane.f32.xlu0 %v589
        %v621 = vpop.xlane.xlu0 %620
        %622 = vadd.xlane.f32.xlu0 %v591
        %v623 = vpop.xlane.xlu0 %622
        %624 = vadd.xlane.f32.xlu0 %v593
        %v625 = vpop.xlane.xlu0 %624
        %626 = vadd.xlane.f32.xlu0 %v595
        %v627 = vpop.xlane.xlu0 %626
        %628 = vadd.xlane.f32.xlu0 %v597
        %v629 = vpop.xlane.xlu0 %628
        %630 = vadd.xlane.f32.xlu0 %v599
        %v631 = vpop.xlane.xlu0 %630
        %632 = vadd.xlane.f32.xlu0 %v601
        %v633 = vpop.xlane.xlu0 %632
        %634 = vadd.xlane.f32.xlu0 %v603
        %v635 = vpop.xlane.xlu0 %634
        %636 = vadd.xlane.f32.xlu0 %v605
        %v637 = vpop.xlane.xlu0 %636
        %v638 = vrcp.pop %v607
        %v639 = vrcp.pop %v609
        %v640 = vrcp.pop %v611
        %v641 = vrcp.pop %v613
        %v642 = vrcp.pop %v615
        %v643 = vrcp.pop %v617
        %v644 = vrcp.pop %v619
        %v645 = vrcp.pop %v621
        %v646 = vrcp.pop %v623
        %v647 = vrcp.pop %v625
        %v648 = vrcp.pop %v627
        %v649 = vrcp.pop %v629
        %v650 = vrcp.pop %v631
        %v651 = vrcp.pop %v633
        %v652 = vrcp.pop %v635
        %v653 = vrcp.pop %v637
        %v654 = vmul.f32 %v575, %v638
        %v655 = vmul.f32 %v577, %v639
        %v656 = vmul.f32 %v579, %v640
        %v657 = vmul.f32 %v581, %v641
        %v658 = vmul.f32 %v583, %v642
        %v659 = vmul.f32 %v585, %v643
        %v660 = vmul.f32 %v587, %v644
        %v661 = vmul.f32 %v589, %v645
        %v662 = vmul.f32 %v591, %v646
        %v663 = vmul.f32 %v593, %v647
        %v664 = vmul.f32 %v595, %v648
        %v665 = vmul.f32 %v597, %v649
        %v666 = vmul.f32 %v599, %v650
        %v667 = vmul.f32 %v601, %v651
        %v668 = vmul.f32 %v603, %v652
        %v669 = vmul.f32 %v605, %v653
        %v670 = vpack.c.bf16 %v523, %v522
        %v671 = vpack.c.bf16 %v525, %v524
        %v672 = vpack.c.bf16 %v655, %v654
        %v673 = vpack.c.bf16 %v657, %v656
        %v674 = vpack.c.bf16 %v659, %v658
        %v675 = vpack.c.bf16 %v661, %v660
        %v676 = vpack.c.bf16 %v663, %v662
        %v677 = vpack.c.bf16 %v665, %v664
        %v678 = vpack.c.bf16 %v667, %v666
        %v679 = vpack.c.bf16 %v669, %v668
        %680 = vmatprep.subr.bf16.mxu0 0
        %681 = vmatpush1.bf16.msra.mxu0 %v672
        %682 = vmatprep.subr.bf16.mxu0 0
        %683 = vmatpush1.bf16.msra.mxu0 %v673
        %684 = vmatprep.subr.bf16.mxu0 0
        %685 = vmatpush1.bf16.msra.mxu0 %v674
        %686 = vmatprep.subr.bf16.mxu0 0
        %687 = vmatpush1.bf16.msra.mxu0 %v675
        %688 = vmatprep.subr.bf16.mxu0 0
        %689 = vmatpush1.bf16.msra.mxu0 %v676
        %690 = vmatprep.subr.bf16.mxu0 0
        %691 = vmatpush1.bf16.msra.mxu0 %v677
        %692 = vmatprep.subr.bf16.mxu0 0
        %693 = vmatpush1.bf16.msra.mxu0 %v678
        %694 = vmatprep.subr.bf16.mxu0 0
        %695 = vmatpush1.bf16.msra.mxu0 %v679
        %696 = vmatprep.subr.bf16.mxu0 0
        %697 = vmatpush1.bf16.msra.mxu0 0
        %698 = vmatprep.subr.bf16.mxu0 0
        %699 = vmatpush1.bf16.msra.mxu0 0
        %700 = vmatprep.subr.bf16.mxu0 0
        %701 = vmatpush1.bf16.msra.mxu0 0
        %702 = vmatprep.subr.bf16.mxu0 0
        %703 = vmatpush1.bf16.msra.mxu0 0
        %704 = vmatprep.subr.bf16.mxu0 0
        %705 = vmatpush1.bf16.msra.mxu0 0
        %706 = vmatprep.subr.bf16.mxu0 0
        %707 = vmatpush1.bf16.msra.mxu0 0
        %708 = vmatprep.subr.bf16.mxu0 0
        %709 = vmatpush1.bf16.msra.mxu0 0
        %710 = vmatprep.subr.bf16.mxu0 0
        %711 = vmatpush1.bf16.msra.mxu0 0
        %712 = vmatprep.mubr.bf16.mxu0 0
        %713 = vmatmul.mubr.bf16.gmra.mrb[0].mxu0 %v670
        %v714 = vpop.f32.mrb[0].mxu0
        %v715 = vadd.f32 0.0, %v714
        %v716 = vpop.f32.mrb[0].mxu0
        %v717 = vpop.f32.mrb[0].mxu0
        %v718 = vadd.f32 0.0, %v717
        %v719 = vpop.f32.mrb[0].mxu0
        %720 = vmatprep.mubr.bf16.mxu0 0
        %721 = vmatmul.mubr.bf16.gmra.mrb[0].mxu0 %v671
        %v722 = vpop.f32.mrb[0].mxu0
        %v723 = vadd.f32 0.0, %v722
        %v724 = vpop.f32.mrb[0].mxu0
        %v725 = vpop.f32.mrb[0].mxu0
        %v726 = vadd.f32 0.0, %v725
        %v727 = vpop.f32.mrb[0].mxu0
        %728 = vdwg.mxu0
        %v729 = vstv %s198
        %v730 = vmul.f32 %v729, %v715
        %v731 = vmul.f32 %v729, %v718
        %v732 = vmul.f32 %v729, %v723
        %v733 = vmul.f32 %v729, %v726
        %v734 = vadd.f32 %v730, %v199
        %v735 = vadd.f32 %v731, %v200
        %v736 = vadd.f32 %v732, %v201
        %v737 = vadd.f32 %v733, %v202
        %738 = vst [vmem:[%s191] sm:$0xff] %v734
        %739 = vst [vmem:[%s191 + $0x8] sm:$0xff] %v735
        %740 = vst [vmem:[%s191 + $0x10] sm:$0xff] %v736
        %741 = vst [vmem:[%s191 + $0x18] sm:$0xff] %v737
        %s742 = sand.u32 %s116, 1
        %s743 = scalar_lea.sflag [#allocation4], %s742
        %s744 = sand.u32 %s116, 1
        %s745 = smul.addr %s744, 32
        %s746 = scalar_lea.vmem [#allocation3], %s745
        // Predicated region
        $region37: #{tpu_custom_call.1} parent=35 // pred_check
          %p747 = pneg %p126
        $region38: #{tpu_custom_call.1} parent=35 // pred_check_branch
          %749 = sbr.rel (%p747) target = $region40
        $region39: #{tpu_custom_call.1} parent=35 // pred_region
          %s751 = ssub.s32 512, 512
          %752 = vsyncadd %s743, %s751
          %s753 = smul.addr %s19, 4
          %s754 = smul.addr %s753, 128
          %s755 = scalar_lea.hbm %s4, %s754
          %s756 = sshll.u32 %s746, 4
          %s757 = int_to_ptr.vmem [resolvable:$true] %s756
          %762 = dma.vmem_to_hbm [thread:$0]  %s757, 512, %s755, %s743, 128, 128, 8
        $region40: #{tpu_custom_call.1} parent=35 // pred_fallthru
          _
      $region36: #{tpu_custom_call.1} parent=5 // pred_fallthru
        _
      %p763 = scmp.le.s32.totalorder 2, %s14
      // Predicated region
      $region41: #{tpu_custom_call.1} parent=5 // pred_check
        %p764 = pneg %p763
      $region42: #{tpu_custom_call.1} parent=5 // pred_check_branch
        %766 = sbr.rel (%p764) target = $region44
      $region43: #{tpu_custom_call.1} parent=5 // pred_region
        %s767 = ssub.s32 %s14, 2
        // Predicated region
        $region45: #{tpu_custom_call.1} parent=43 // pred_check
          %p768 = pneg %p132
        $region46: #{tpu_custom_call.1} parent=43 // pred_check_branch
          %770 = sbr.rel (%p768) target = $region48
        $region47: #{tpu_custom_call.1} parent=43 // pred_region
          %s771 = sand.u32 %s117, 1
          %s772 = scalar_lea.sflag [#allocation4], %s771
          %s773 = sand.u32 %s117, 1
          %s774 = smul.addr %s773, 32
          %s775 = scalar_lea.vmem [#allocation3], %s774
          %776 = dma.done %s772, 512
        $region48: #{tpu_custom_call.1} parent=43 // pred_fallthru
          _
      $region44: #{tpu_custom_call.1} parent=5 // pred_fallthru
        _
    $region6: #{tpu_custom_call.1} parent=1 // loop_footer
      %s18 = sadd.s32 1, %s14
    $region7: #{tpu_custom_call.1} parent=1 // loop_footer_branch
      %13 = sbr.rel target = $region3
    $region8: #{tpu_custom_call.1} parent=1 // loop_exit
      _
    %777 = vsyncpa [#allocation4], 1
    %s778 = scalar_lea.sflag [#allocation4], 1
    %779 = vsyncpa %s778, 1

</llo_original>
